<compile_context>
chip_gen: v5e
topology: v5e:2x2
jax: 0.10.0
libtpu: 0.0.40
codegen_flags: <defaults>
</compile_context>

<pallas_src>
import jax
import jax.numpy as jnp
from jax.experimental import pallas as pl
from jax.experimental.pallas import tpu as pltpu

# ---- model config (small, consistent with the module) ----
EMB_DIM = 64
HID_DIM = 32
INPUT_DIM = 20          # len(source_words) - synthetic vocab
INTENT_DIM = 5          # len(label_words)  - synthetic label set
N_LAYERS = 2
KERNEL_SIZE = 3         # must be odd
MAX_LENGTH = 50
SCALE = 0.5 ** 0.5      # torch.sqrt(torch.FloatTensor([0.5]))

VOCAB_PAD = 32          # vocab padded to a sublane-friendly size for the one-hot matmul
OUT_LANES = 2 * EMB_DIM  # = 128: lane-dense output slab (conved | combined)


def encoder_kernel(src_ref, pos_ref, tokcat_ref, w_e2h_ref, b_e2h_ref,
                   p_prev_ref, p_next_ref,
                   wa_ref, ba_ref, wg_ref, bg_ref,
                   w_out_ref, b_out_ref,
                   pool_ref, w_int_ref, b_int_ref,
                   slab_ref, intent_ref):
    R = src_ref.shape[0]              # B*S rows
    V = tokcat_ref.shape[0]           # padded vocab
    L = wa_ref.shape[0]               # n_layers
    E2 = w_out_ref.shape[1]           # 2*emb_dim (lane-dense slab width)
    E = E2 // 2

    # ---- fused embedding: one_hot(src) @ [tok_emb | tok_emb] + tiled positional ----
    src = src_ref[...]                                                  # [R, 1] int32
    vocab_iota = jax.lax.broadcasted_iota(jnp.int32, (R, V), 1)
    onehot = (vocab_iota == src).astype(jnp.float32)                    # [R, V]
    emb128 = jnp.dot(onehot, tokcat_ref[...],
                     preferred_element_type=jnp.float32) + pos_ref[...]  # [R, 2E] (emb in both halves)

    # ---- emb2hid: [R, 2E] x [2E, H] (rows E:2E of the weight are zero) ----
    x = jnp.dot(emb128, w_e2h_ref[...],
                preferred_element_type=jnp.float32) + b_e2h_ref[...]     # [R, H]

    # ---- conv stack: Conv1d(H -> 2H, k, same) + GLU + scaled residual ----
    p_prev = p_prev_ref[...]                                            # [R, R] constant shift
    p_next = p_next_ref[...]                                            # [R, R] constant shift
    for l in range(L):
        # sequence-shifted copies (boundary rows zeroed by the shift matrices)
        x_prev = jnp.dot(p_prev, x, preferred_element_type=jnp.float32)  # x[b, s-1]
        x_next = jnp.dot(p_next, x, preferred_element_type=jnp.float32)  # x[b, s+1]
        im2col = jnp.concatenate([x_prev, x, x_next], axis=-1)           # [R, K*H]
        # one fused dot per GLU half -> no lane-axis split of the 2H conv output
        a = jnp.dot(im2col, wa_ref[l], preferred_element_type=jnp.float32) + ba_ref[l]
        g = jnp.dot(im2col, wg_ref[l], preferred_element_type=jnp.float32) + bg_ref[l]
        x = (a * jax.nn.sigmoid(g) + x) * SCALE                          # GLU + residual

    # ---- hid2emb fused with combined, lane-dense [conved | combined] slab ----
    # w_out = [w_h2e | w_h2e*SCALE], b_out = [b_h2e | b_h2e*SCALE]
    lane_idx = jax.lax.broadcasted_iota(jnp.int32, (1, E2), 1)
    lane_scale = jnp.where(lane_idx >= E, SCALE, 0.0).astype(jnp.float32)
    slab = jnp.dot(x, w_out_ref[...], preferred_element_type=jnp.float32) + b_out_ref[...]
    slab = slab + emb128 * lane_scale                                    # combined = (conved + emb)*SCALE
    slab_ref[...] = slab                                                 # unmasked 128-lane store

    # ---- intent head: mean over seq (constant pooling matmul) + padded linear ----
    pooled = jnp.dot(pool_ref[...], slab, preferred_element_type=jnp.float32)   # [B, 2E]
    intent_ref[...] = jnp.dot(pooled, w_int_ref[...],
                              preferred_element_type=jnp.float32) + b_int_ref[...]  # [B, 128]


def init_params(key):
    ks = jax.random.split(key, 10)
    s = 0.1
    return {
        "tok_emb": jax.random.normal(ks[0], (INPUT_DIM, EMB_DIM), jnp.float32) * s,
        "pos_emb": jax.random.normal(ks[1], (MAX_LENGTH, EMB_DIM), jnp.float32) * s,
        "w_e2h":   jax.random.normal(ks[2], (EMB_DIM, HID_DIM), jnp.float32) * s,
        "b_e2h":   jax.random.normal(ks[3], (1, HID_DIM), jnp.float32) * s,
        # conv weight stored as [layer, tap, in_ch, out_ch]  (PyTorch: [out_ch, in_ch, tap])
        # TODO(synk): real checkpoint loading must transpose PyTorch Conv1d/Linear weights.
        "conv_w":  jax.random.normal(ks[4], (N_LAYERS, KERNEL_SIZE, HID_DIM, 2 * HID_DIM),
                                     jnp.float32) * s,
        "conv_b":  jax.random.normal(ks[5], (N_LAYERS, 1, 2 * HID_DIM), jnp.float32) * s,
        "w_h2e":   jax.random.normal(ks[6], (HID_DIM, EMB_DIM), jnp.float32) * s,
        "b_h2e":   jax.random.normal(ks[7], (1, EMB_DIM), jnp.float32) * s,
        "w_int":   jax.random.normal(ks[8], (EMB_DIM, INTENT_DIM), jnp.float32) * s,
        "b_int":   jax.random.normal(ks[9], (1, INTENT_DIM), jnp.float32) * s,
    }


@jax.jit
def encoder_forward(src, params):
    B, S = src.shape
    R = B * S
    E, H = EMB_DIM, HID_DIM

    # ---------- trace-time repackaging (tiny; keeps the kernel lane-dense) ----------
    # token table duplicated along lanes (emb appears in both halves of the 128-lane slab)
    tok_pad = jnp.zeros((VOCAB_PAD, E), jnp.float32).at[:INPUT_DIM].set(params["tok_emb"])
    tok_cat = jnp.concatenate([tok_pad, tok_pad], axis=1)                  # [V_pad, 2E]

    # positional rows for 0..S-1, duplicated along lanes and tiled over batch
    pos = params["pos_emb"][:S]                                            # [S, E]
    pos_tiled = jnp.tile(jnp.concatenate([pos, pos], axis=1), (B, 1))      # [R, 2E]

    # emb2hid weight padded to consume the duplicated-lane embedding input
    w_e2h_pad = jnp.concatenate([params["w_e2h"],
                                 jnp.zeros((E, H), jnp.float32)], axis=0)  # [2E, H]

    # conv weights: [L, K, H, 2H] -> GLU halves as [L, K*H, H] for the fused im2col dot
    cw = params["conv_w"]
    wa = cw[..., :H].reshape(N_LAYERS, KERNEL_SIZE * H, H)
    wg = cw[..., H:].reshape(N_LAYERS, KERNEL_SIZE * H, H)
    ba = params["conv_b"][..., :H]                                         # [L, 1, H]
    bg = params["conv_b"][..., H:]                                         # [L, 1, H]

    # constant sequence-shift matrices (zero across sequence boundaries)
    r = jnp.arange(R)
    c = jnp.arange(R)
    p_prev = ((r[:, None] == c[None, :] + 1) & (r[:, None] % S != 0)).astype(jnp.float32)
    p_next = ((r[:, None] + 1 == c[None, :]) & (r[:, None] % S != S - 1)).astype(jnp.float32)

    # hid2emb fused with the residual combine scale -> one [H, 2E] weight
    w_out_cat = jnp.concatenate([params["w_h2e"], params["w_h2e"] * SCALE], axis=1)  # [H, 2E]
    b_out_cat = jnp.concatenate([params["b_h2e"], params["b_h2e"] * SCALE], axis=1)  # [1, 2E]

    # mean-over-sequence pooling as a constant [B, R] matmul
    pool_mat = (r[None, :] // S == jnp.arange(B)[:, None]).astype(jnp.float32) / S   # [B, R]

    # intent head reads the "combined" half of the pooled slab; pad to 128 output lanes
    w_int_big = jnp.zeros((OUT_LANES, 128), jnp.float32).at[E:2 * E, :INTENT_DIM].set(params["w_int"])
    b_int_pad = jnp.zeros((1, 128), jnp.float32).at[:, :INTENT_DIM].set(params["b_int"])

    src_col = src.reshape(R, 1).astype(jnp.int32)

    vmem = pl.BlockSpec(memory_space=pltpu.MemorySpace.VMEM)
    slab, intent_pad = pl.pallas_call(
        encoder_kernel,
        out_shape=(jax.ShapeDtypeStruct((R, OUT_LANES), jnp.float32),
                   jax.ShapeDtypeStruct((B, 128), jnp.float32)),
        in_specs=[vmem] * 16,
        out_specs=(vmem, vmem),
    )(src_col, pos_tiled, tok_cat, w_e2h_pad, params["b_e2h"],
      p_prev, p_next, wa, ba, wg, bg,
      w_out_cat, b_out_cat, pool_mat, w_int_big, b_int_pad)

    conved = slab[:, :E].reshape(B, S, E)
    combined = slab[:, E:].reshape(B, S, E)
    intent = intent_pad[:, :INTENT_DIM]
    return conved, combined, intent


def encoder_reference(src, params):
    """Pure-JAX reference mirroring the PyTorch forward (inference / no dropout)."""
    B, S = src.shape
    pos = jnp.arange(S)[None, :]
    emb = params["tok_emb"][src] + params["pos_emb"][pos]                  # [B, S, E]
    x = jnp.einsum('bse,eh->bsh', emb, params["w_e2h"]) + params["b_e2h"]
    pad = (KERNEL_SIZE - 1) // 2
    for l in range(N_LAYERS):
        xp = jnp.pad(x, ((0, 0), (pad, pad), (0, 0)))
        conv = sum(jnp.einsum('bsh,hc->bsc', xp[:, t:t + S, :], params["conv_w"][l, t])
                   for t in range(KERNEL_SIZE)) + params["conv_b"][l]
        a, g = conv[..., :HID_DIM], conv[..., HID_DIM:]
        x = (a * jax.nn.sigmoid(g) + x) * SCALE
    conved = jnp.einsum('bsh,he->bse', x, params["w_h2e"]) + params["b_h2e"]
    combined = (conved + emb) * SCALE
    pooled = combined.mean(axis=1)
    intent = pooled @ params["w_int"] + params["b_int"]
    return conved, combined, intent


if __name__ == "__main__":
    key = jax.random.PRNGKey(0)
    pkey, skey = jax.random.split(key)
    params = init_params(pkey)

    B, S = 2, 8
    src = jax.random.randint(skey, (B, S), 0, INPUT_DIM, dtype=jnp.int32)

    conved, combined, intent = encoder_forward(src, params)
    jax.block_until_ready((conved, combined, intent))

    assert conved.shape == (B, S, EMB_DIM)
    assert combined.shape == (B, S, EMB_DIM)
    assert intent.shape == (B, INTENT_DIM)

    r_conved, r_combined, r_intent = encoder_reference(src, params)
    assert jnp.allclose(conved, r_conved, atol=1e-4, rtol=1e-4)
    assert jnp.allclose(combined, r_combined, atol=1e-4, rtol=1e-4)
    assert jnp.allclose(intent, r_intent, atol=1e-4, rtol=1e-4)

    print("KERNEL_OK")
</pallas_src>

<mosaic_0001>
module attributes {stable_mosaic.version = 11 : i64} {
  func.func @encoder_kernel(%arg0: memref<16x1xi32, #tpu.memory_space<vmem>>, %arg1: memref<16x128xf32, #tpu.memory_space<vmem>>, %arg2: memref<32x128xf32, #tpu.memory_space<vmem>>, %arg3: memref<128x32xf32, #tpu.memory_space<vmem>>, %arg4: memref<1x32xf32, #tpu.memory_space<vmem>>, %arg5: memref<16x16xf32, #tpu.memory_space<vmem>>, %arg6: memref<16x16xf32, #tpu.memory_space<vmem>>, %arg7: memref<2x96x32xf32, #tpu.memory_space<vmem>>, %arg8: memref<2x1x32xf32, #tpu.memory_space<vmem>>, %arg9: memref<2x96x32xf32, #tpu.memory_space<vmem>>, %arg10: memref<2x1x32xf32, #tpu.memory_space<vmem>>, %arg11: memref<32x128xf32, #tpu.memory_space<vmem>>, %arg12: memref<1x128xf32, #tpu.memory_space<vmem>>, %arg13: memref<2x16xf32, #tpu.memory_space<vmem>>, %arg14: memref<128x128xf32, #tpu.memory_space<vmem>>, %arg15: memref<1x128xf32, #tpu.memory_space<vmem>>, %arg16: memref<16x128xf32, #tpu.memory_space<vmem>>, %arg17: memref<2x128xf32, #tpu.memory_space<vmem>>) attributes {dimension_semantics = [], scalar_prefetch = 0 : i64, scratch_operands = 0 : i64, tpu.core_type = #tpu.core_type<tc>} {
    %c0 = arith.constant 0 : index
    %c0_0 = arith.constant 0 : index
    %0 = vector.load %arg0[%c0, %c0_0] : memref<16x1xi32, #tpu.memory_space<vmem>>, vector<16x1xi32>
    %1 = tpu.iota {dimensions = array<i32: 1>} : vector<16x32xi32>
    %2 = vector.broadcast %0 : vector<16x1xi32> to vector<16x32xi32>
    %3 = arith.cmpi eq, %1, %2 : vector<16x32xi32>
    %4 = arith.extui %3 : vector<16x32xi1> to vector<16x32xi32>
    %5 = arith.sitofp %4 : vector<16x32xi32> to vector<16x32xf32>
    %c0_1 = arith.constant 0 : index
    %c0_2 = arith.constant 0 : index
    %6 = vector.load %arg2[%c0_1, %c0_2] : memref<32x128xf32, #tpu.memory_space<vmem>>, vector<32x128xf32>
    %cst = arith.constant dense<0.000000e+00> : vector<16x128xf32>
    %7 = tpu.matmul %5, %6, %cst {dimension_numbers = #tpu.dot_dimension_numbers<[1], [0], [0], [1], [0, 0, 1, 1], [], []>} : vector<16x32xf32>, vector<32x128xf32>, vector<16x128xf32> -> vector<16x128xf32>
    %c0_3 = arith.constant 0 : index
    %c0_4 = arith.constant 0 : index
    %8 = vector.load %arg1[%c0_3, %c0_4] : memref<16x128xf32, #tpu.memory_space<vmem>>, vector<16x128xf32>
    %9 = arith.addf %7, %8 : vector<16x128xf32>
    %c0_5 = arith.constant 0 : index
    %c0_6 = arith.constant 0 : index
    %10 = vector.load %arg3[%c0_5, %c0_6] : memref<128x32xf32, #tpu.memory_space<vmem>>, vector<128x32xf32>
    %cst_7 = arith.constant dense<0.000000e+00> : vector<16x32xf32>
    %11 = tpu.matmul %9, %10, %cst_7 {dimension_numbers = #tpu.dot_dimension_numbers<[1], [0], [0], [1], [0, 0, 1, 1], [], []>} : vector<16x128xf32>, vector<128x32xf32>, vector<16x32xf32> -> vector<16x32xf32>
    %c0_8 = arith.constant 0 : index
    %c0_9 = arith.constant 0 : index
    %12 = vector.load %arg4[%c0_8, %c0_9] : memref<1x32xf32, #tpu.memory_space<vmem>>, vector<1x32xf32>
    %13 = vector.broadcast %12 : vector<1x32xf32> to vector<16x32xf32>
    %14 = arith.addf %11, %13 : vector<16x32xf32>
    %c0_10 = arith.constant 0 : index
    %c0_11 = arith.constant 0 : index
    %15 = vector.load %arg5[%c0_10, %c0_11] : memref<16x16xf32, #tpu.memory_space<vmem>>, vector<16x16xf32>
    %c0_12 = arith.constant 0 : index
    %c0_13 = arith.constant 0 : index
    %16 = vector.load %arg6[%c0_12, %c0_13] : memref<16x16xf32, #tpu.memory_space<vmem>>, vector<16x16xf32>
    %cst_14 = arith.constant dense<0.000000e+00> : vector<16x32xf32>
    %17 = tpu.matmul %15, %14, %cst_14 {dimension_numbers = #tpu.dot_dimension_numbers<[1], [0], [0], [1], [0, 0, 1, 1], [], []>} : vector<16x16xf32>, vector<16x32xf32>, vector<16x32xf32> -> vector<16x32xf32>
    %cst_15 = arith.constant dense<0.000000e+00> : vector<16x32xf32>
    %18 = tpu.matmul %16, %14, %cst_15 {dimension_numbers = #tpu.dot_dimension_numbers<[1], [0], [0], [1], [0, 0, 1, 1], [], []>} : vector<16x16xf32>, vector<16x32xf32>, vector<16x32xf32> -> vector<16x32xf32>
    %19 = tpu.concatenate %17, %14, %18 in 1 : vector<16x32xf32>, vector<16x32xf32>, vector<16x32xf32> -> vector<16x96xf32>
    %c0_16 = arith.constant 0 : index
    %c0_17 = arith.constant 0 : index
    %c0_18 = arith.constant 0 : index
    %20 = vector.load %arg7[%c0_16, %c0_17, %c0_18] : memref<2x96x32xf32, #tpu.memory_space<vmem>>, vector<1x96x32xf32>
    %21 = vector.shape_cast %20 : vector<1x96x32xf32> to vector<96x32xf32>
    %cst_19 = arith.constant dense<0.000000e+00> : vector<16x32xf32>
    %22 = tpu.matmul %19, %21, %cst_19 {dimension_numbers = #tpu.dot_dimension_numbers<[1], [0], [0], [1], [0, 0, 1, 1], [], []>} : vector<16x96xf32>, vector<96x32xf32>, vector<16x32xf32> -> vector<16x32xf32>
    %c0_20 = arith.constant 0 : index
    %c0_21 = arith.constant 0 : index
    %c0_22 = arith.constant 0 : index
    %23 = vector.load %arg8[%c0_20, %c0_21, %c0_22] : memref<2x1x32xf32, #tpu.memory_space<vmem>>, vector<1x1x32xf32>
    %24 = vector.shape_cast %23 : vector<1x1x32xf32> to vector<1x32xf32>
    %25 = vector.broadcast %24 : vector<1x32xf32> to vector<16x32xf32>
    %26 = arith.addf %22, %25 : vector<16x32xf32>
    %c0_23 = arith.constant 0 : index
    %c0_24 = arith.constant 0 : index
    %c0_25 = arith.constant 0 : index
    %27 = vector.load %arg9[%c0_23, %c0_24, %c0_25] : memref<2x96x32xf32, #tpu.memory_space<vmem>>, vector<1x96x32xf32>
    %28 = vector.shape_cast %27 : vector<1x96x32xf32> to vector<96x32xf32>
    %cst_26 = arith.constant dense<0.000000e+00> : vector<16x32xf32>
    %29 = tpu.matmul %19, %28, %cst_26 {dimension_numbers = #tpu.dot_dimension_numbers<[1], [0], [0], [1], [0, 0, 1, 1], [], []>} : vector<16x96xf32>, vector<96x32xf32>, vector<16x32xf32> -> vector<16x32xf32>
    %c0_27 = arith.constant 0 : index
    %c0_28 = arith.constant 0 : index
    %c0_29 = arith.constant 0 : index
    %30 = vector.load %arg10[%c0_27, %c0_28, %c0_29] : memref<2x1x32xf32, #tpu.memory_space<vmem>>, vector<1x1x32xf32>
    %31 = vector.shape_cast %30 : vector<1x1x32xf32> to vector<1x32xf32>
    %32 = vector.broadcast %31 : vector<1x32xf32> to vector<16x32xf32>
    %33 = arith.addf %29, %32 : vector<16x32xf32>
    %34 = arith.negf %33 : vector<16x32xf32>
    %35 = math.exp %34 : vector<16x32xf32>
    %cst_30 = arith.constant 1.000000e+00 : f32
    %36 = vector.broadcast %cst_30 : f32 to vector<16x32xf32>
    %37 = arith.addf %36, %35 : vector<16x32xf32>
    %38 = arith.divf %36, %37 : vector<16x32xf32>
    %39 = arith.mulf %26, %38 : vector<16x32xf32>
    %40 = arith.addf %39, %14 : vector<16x32xf32>
    %cst_31 = arith.constant 0.707106769 : f32
    %41 = vector.broadcast %cst_31 : f32 to vector<16x32xf32>
    %42 = arith.mulf %40, %41 : vector<16x32xf32>
    %cst_32 = arith.constant dense<0.000000e+00> : vector<16x32xf32>
    %43 = tpu.matmul %15, %42, %cst_32 {dimension_numbers = #tpu.dot_dimension_numbers<[1], [0], [0], [1], [0, 0, 1, 1], [], []>} : vector<16x16xf32>, vector<16x32xf32>, vector<16x32xf32> -> vector<16x32xf32>
    %cst_33 = arith.constant dense<0.000000e+00> : vector<16x32xf32>
    %44 = tpu.matmul %16, %42, %cst_33 {dimension_numbers = #tpu.dot_dimension_numbers<[1], [0], [0], [1], [0, 0, 1, 1], [], []>} : vector<16x16xf32>, vector<16x32xf32>, vector<16x32xf32> -> vector<16x32xf32>
    %45 = tpu.concatenate %43, %42, %44 in 1 : vector<16x32xf32>, vector<16x32xf32>, vector<16x32xf32> -> vector<16x96xf32>
    %c1 = arith.constant 1 : index
    %c0_34 = arith.constant 0 : index
    %c0_35 = arith.constant 0 : index
    %46 = vector.load %arg7[%c1, %c0_34, %c0_35] : memref<2x96x32xf32, #tpu.memory_space<vmem>>, vector<1x96x32xf32>
    %47 = vector.shape_cast %46 : vector<1x96x32xf32> to vector<96x32xf32>
    %cst_36 = arith.constant dense<0.000000e+00> : vector<16x32xf32>
    %48 = tpu.matmul %45, %47, %cst_36 {dimension_numbers = #tpu.dot_dimension_numbers<[1], [0], [0], [1], [0, 0, 1, 1], [], []>} : vector<16x96xf32>, vector<96x32xf32>, vector<16x32xf32> -> vector<16x32xf32>
    %c1_37 = arith.constant 1 : index
    %c0_38 = arith.constant 0 : index
    %c0_39 = arith.constant 0 : index
    %49 = vector.load %arg8[%c1_37, %c0_38, %c0_39] : memref<2x1x32xf32, #tpu.memory_space<vmem>>, vector<1x1x32xf32>
    %50 = vector.shape_cast %49 : vector<1x1x32xf32> to vector<1x32xf32>
    %51 = vector.broadcast %50 : vector<1x32xf32> to vector<16x32xf32>
    %52 = arith.addf %48, %51 : vector<16x32xf32>
    %c1_40 = arith.constant 1 : index
    %c0_41 = arith.constant 0 : index
    %c0_42 = arith.constant 0 : index
    %53 = vector.load %arg9[%c1_40, %c0_41, %c0_42] : memref<2x96x32xf32, #tpu.memory_space<vmem>>, vector<1x96x32xf32>
    %54 = vector.shape_cast %53 : vector<1x96x32xf32> to vector<96x32xf32>
    %cst_43 = arith.constant dense<0.000000e+00> : vector<16x32xf32>
    %55 = tpu.matmul %45, %54, %cst_43 {dimension_numbers = #tpu.dot_dimension_numbers<[1], [0], [0], [1], [0, 0, 1, 1], [], []>} : vector<16x96xf32>, vector<96x32xf32>, vector<16x32xf32> -> vector<16x32xf32>
    %c1_44 = arith.constant 1 : index
    %c0_45 = arith.constant 0 : index
    %c0_46 = arith.constant 0 : index
    %56 = vector.load %arg10[%c1_44, %c0_45, %c0_46] : memref<2x1x32xf32, #tpu.memory_space<vmem>>, vector<1x1x32xf32>
    %57 = vector.shape_cast %56 : vector<1x1x32xf32> to vector<1x32xf32>
    %58 = vector.broadcast %57 : vector<1x32xf32> to vector<16x32xf32>
    %59 = arith.addf %55, %58 : vector<16x32xf32>
    %60 = arith.negf %59 : vector<16x32xf32>
    %61 = math.exp %60 : vector<16x32xf32>
    %cst_47 = arith.constant 1.000000e+00 : f32
    %62 = vector.broadcast %cst_47 : f32 to vector<16x32xf32>
    %63 = arith.addf %62, %61 : vector<16x32xf32>
    %64 = arith.divf %62, %63 : vector<16x32xf32>
    %65 = arith.mulf %52, %64 : vector<16x32xf32>
    %66 = arith.addf %65, %42 : vector<16x32xf32>
    %cst_48 = arith.constant 0.707106769 : f32
    %67 = vector.broadcast %cst_48 : f32 to vector<16x32xf32>
    %68 = arith.mulf %66, %67 : vector<16x32xf32>
    %69 = tpu.iota {dimensions = array<i32: 1>} : vector<1x128xi32>
    %c64_i32 = arith.constant 64 : i32
    %70 = vector.broadcast %c64_i32 : i32 to vector<1x128xi32>
    %71 = arith.cmpi sge, %69, %70 : vector<1x128xi32>
    %cst_49 = arith.constant 0.707106769 : f32
    %cst_50 = arith.constant 0.000000e+00 : f32
    %72 = vector.broadcast %cst_49 : f32 to vector<1x128xf32>
    %73 = vector.broadcast %cst_50 : f32 to vector<1x128xf32>
    %74 = arith.select %71, %72, %73 : vector<1x128xi1>, vector<1x128xf32>
    %c0_51 = arith.constant 0 : index
    %c0_52 = arith.constant 0 : index
    %75 = vector.load %arg11[%c0_51, %c0_52] : memref<32x128xf32, #tpu.memory_space<vmem>>, vector<32x128xf32>
    %cst_53 = arith.constant dense<0.000000e+00> : vector<16x128xf32>
    %76 = tpu.matmul %68, %75, %cst_53 {dimension_numbers = #tpu.dot_dimension_numbers<[1], [0], [0], [1], [0, 0, 1, 1], [], []>} : vector<16x32xf32>, vector<32x128xf32>, vector<16x128xf32> -> vector<16x128xf32>
    %c0_54 = arith.constant 0 : index
    %c0_55 = arith.constant 0 : index
    %77 = vector.load %arg12[%c0_54, %c0_55] : memref<1x128xf32, #tpu.memory_space<vmem>>, vector<1x128xf32>
    %78 = vector.broadcast %77 : vector<1x128xf32> to vector<16x128xf32>
    %79 = arith.addf %76, %78 : vector<16x128xf32>
    %80 = vector.broadcast %74 : vector<1x128xf32> to vector<16x128xf32>
    %81 = arith.mulf %9, %80 : vector<16x128xf32>
    %82 = arith.addf %79, %81 : vector<16x128xf32>
    %c0_56 = arith.constant 0 : index
    %c0_57 = arith.constant 0 : index
    %83 = vector.load %arg16[%c0_56, %c0_57] : memref<16x128xf32, #tpu.memory_space<vmem>>, vector<16x128xf32>
    tpu.vector_store %arg16[%c0_56, %c0_57], %82 {strides = array<i32>} : memref<16x128xf32, #tpu.memory_space<vmem>>, vector<16x128xf32>,
    %c0_58 = arith.constant 0 : index
    %c0_59 = arith.constant 0 : index
    %84 = vector.load %arg13[%c0_58, %c0_59] : memref<2x16xf32, #tpu.memory_space<vmem>>, vector<2x16xf32>
    %cst_60 = arith.constant dense<0.000000e+00> : vector<2x128xf32>
    %85 = tpu.matmul %84, %82, %cst_60 {dimension_numbers = #tpu.dot_dimension_numbers<[1], [0], [0], [1], [0, 0, 1, 1], [], []>} : vector<2x16xf32>, vector<16x128xf32>, vector<2x128xf32> -> vector<2x128xf32>
    %c0_61 = arith.constant 0 : index
    %c0_62 = arith.constant 0 : index
    %86 = vector.load %arg14[%c0_61, %c0_62] : memref<128x128xf32, #tpu.memory_space<vmem>>, vector<128x128xf32>
    %cst_63 = arith.constant dense<0.000000e+00> : vector<2x128xf32>
    %87 = tpu.matmul %85, %86, %cst_63 {dimension_numbers = #tpu.dot_dimension_numbers<[1], [0], [0], [1], [0, 0, 1, 1], [], []>} : vector<2x128xf32>, vector<128x128xf32>, vector<2x128xf32> -> vector<2x128xf32>
    %c0_64 = arith.constant 0 : index
    %c0_65 = arith.constant 0 : index
    %88 = vector.load %arg15[%c0_64, %c0_65] : memref<1x128xf32, #tpu.memory_space<vmem>>, vector<1x128xf32>
    %89 = vector.broadcast %88 : vector<1x128xf32> to vector<2x128xf32>
    %90 = arith.addf %87, %89 : vector<2x128xf32>
    %c0_66 = arith.constant 0 : index
    %c0_67 = arith.constant 0 : index
    %91 = vector.load %arg17[%c0_66, %c0_67] : memref<2x128xf32, #tpu.memory_space<vmem>>, vector<2x128xf32>
    tpu.vector_store %arg17[%c0_66, %c0_67], %90 {strides = array<i32>} : memref<2x128xf32, #tpu.memory_space<vmem>>, vector<2x128xf32>,
    return
  }
}

</mosaic_0001>

<llo_original>
// kernel: encoder_forward.1
$region0: #{encoder_forward.1}
  #allocation0 [shape = 'u32[]', space=smem, size = 0x4, offset = 0x4, fixed_abs, tag = 'smem constant byte address 0x4 - core index']
  #allocation1 [shape = 'u32[72,128]{1,0:T(1,128)}', space=vmem, size = 0x9000, scoped, tag = 'internal scratch']
  %s0 = inlined_call_operand.vmem [shape: s32[16,1], index: 0, kind: input, shape index: {}]
  %s1 = inlined_call_operand.vmem [shape: f32[16,128], index: 1, kind: input, shape index: {}]
  %s2 = inlined_call_operand.vmem [shape: f32[32,128], index: 2, kind: input, shape index: {}]
  %s3 = inlined_call_operand.vmem [shape: f32[128,32], index: 3, kind: input, shape index: {}]
  %s4 = inlined_call_operand.vmem [shape: f32[1,32], index: 4, kind: input, shape index: {}]
  %s5 = inlined_call_operand.vmem [shape: f32[16,16], index: 5, kind: input, shape index: {}]
  %s6 = inlined_call_operand.vmem [shape: f32[16,16], index: 6, kind: input, shape index: {}]
  %s7 = inlined_call_operand.vmem [shape: f32[2,96,32], index: 7, kind: input, shape index: {}]
  %s8 = inlined_call_operand.vmem [shape: f32[2,1,32], index: 8, kind: input, shape index: {}]
  %s9 = inlined_call_operand.vmem [shape: f32[2,96,32], index: 9, kind: input, shape index: {}]
  %s10 = inlined_call_operand.vmem [shape: f32[2,1,32], index: 10, kind: input, shape index: {}]
  %s11 = inlined_call_operand.vmem [shape: f32[32,128], index: 11, kind: input, shape index: {}]
  %s12 = inlined_call_operand.vmem [shape: f32[1,128], index: 12, kind: input, shape index: {}]
  %s13 = inlined_call_operand.vmem [shape: f32[2,16], index: 13, kind: input, shape index: {}]
  %s14 = inlined_call_operand.vmem [shape: f32[128,128], index: 14, kind: input, shape index: {}]
  %s15 = inlined_call_operand.vmem [shape: f32[1,128], index: 15, kind: input, shape index: {}]
  %s16 = inlined_call_operand.vmem [shape: f32[16,128], index: 16, kind: output, shape index: {0}]
  %s17 = inlined_call_operand.hbm [shape: f32[2,128], index: 17, kind: output, shape index: {1}]
  %18 = xla_tuple %s16, %s17
  %s19 = sld [smem:[#allocation0]]
  $region82: #{encoder_forward.1} parent=0
    _
  %s21 = ssub.s32 1, %s19
  %s22 = scalar_select 0, %s21, %s19
  $region1: #{encoder_forward.1} parent=0
    #allocation2 [shape = 'u8[1024]{0}', space=vmem, size = 0x400, scoped, tag = 'output window, operand 1, single buffered']
    #allocation3 [shape = 's32[1]{0}', space=sflag, size = 0x4, scoped, tag = 'scoped memory for encoder_forward.1']
    %23 = vsyncpa [#allocation3], 0
    // Predicated region
    $region2: #{encoder_forward.1} parent=1 // pred_check
      _
    $region3: #{encoder_forward.1} parent=1 // pred_check_branch
      %25 = sbr.rel (0) target = $region5
    $region4: #{encoder_forward.1} parent=1 // pred_region
      _
    $region5: #{encoder_forward.1} parent=1 // pred_fallthru
      _
    // Predicated region
    $region6: #{encoder_forward.1} parent=1 // pred_check
      _
    $region7: #{encoder_forward.1} parent=1 // pred_check_branch
      %27 = sbr.rel (0) target = $region9
    $region8: #{encoder_forward.1} parent=1 // pred_region
      _
    $region9: #{encoder_forward.1} parent=1 // pred_fallthru
      _
    // Predicated region
    $region10: #{encoder_forward.1} parent=1 // pred_check
      _
    $region11: #{encoder_forward.1} parent=1 // pred_check_branch
      %29 = sbr.rel (0) target = $region13
    $region12: #{encoder_forward.1} parent=1 // pred_region
      _
    $region13: #{encoder_forward.1} parent=1 // pred_fallthru
      _
    // Predicated region
    $region14: #{encoder_forward.1} parent=1 // pred_check
      _
    $region15: #{encoder_forward.1} parent=1 // pred_check_branch
      %31 = sbr.rel (0) target = $region17
    $region16: #{encoder_forward.1} parent=1 // pred_region
      _
    $region17: #{encoder_forward.1} parent=1 // pred_fallthru
      _
    // Predicated region
    $region18: #{encoder_forward.1} parent=1 // pred_check
      _
    $region19: #{encoder_forward.1} parent=1 // pred_check_branch
      %33 = sbr.rel (0) target = $region21
    $region20: #{encoder_forward.1} parent=1 // pred_region
      _
    $region21: #{encoder_forward.1} parent=1 // pred_fallthru
      _
    // Predicated region
    $region22: #{encoder_forward.1} parent=1 // pred_check
      _
    $region23: #{encoder_forward.1} parent=1 // pred_check_branch
      %35 = sbr.rel (0) target = $region25
    $region24: #{encoder_forward.1} parent=1 // pred_region
      _
    $region25: #{encoder_forward.1} parent=1 // pred_fallthru
      _
    // Predicated region
    $region26: #{encoder_forward.1} parent=1 // pred_check
      _
    $region27: #{encoder_forward.1} parent=1 // pred_check_branch
      %37 = sbr.rel (0) target = $region29
    $region28: #{encoder_forward.1} parent=1 // pred_region
      _
    $region29: #{encoder_forward.1} parent=1 // pred_fallthru
      _
    // Predicated region
    $region30: #{encoder_forward.1} parent=1 // pred_check
      _
    $region31: #{encoder_forward.1} parent=1 // pred_check_branch
      %39 = sbr.rel (0) target = $region33
    $region32: #{encoder_forward.1} parent=1 // pred_region
      _
    $region33: #{encoder_forward.1} parent=1 // pred_fallthru
      _
    // Predicated region
    $region34: #{encoder_forward.1} parent=1 // pred_check
      _
    $region35: #{encoder_forward.1} parent=1 // pred_check_branch
      %41 = sbr.rel (0) target = $region37
    $region36: #{encoder_forward.1} parent=1 // pred_region
      _
    $region37: #{encoder_forward.1} parent=1 // pred_fallthru
      _
    // Predicated region
    $region38: #{encoder_forward.1} parent=1 // pred_check
      _
    $region39: #{encoder_forward.1} parent=1 // pred_check_branch
      %43 = sbr.rel (0) target = $region41
    $region40: #{encoder_forward.1} parent=1 // pred_region
      _
    $region41: #{encoder_forward.1} parent=1 // pred_fallthru
      _
    // Predicated region
    $region42: #{encoder_forward.1} parent=1 // pred_check
      _
    $region43: #{encoder_forward.1} parent=1 // pred_check_branch
      %45 = sbr.rel (0) target = $region45
    $region44: #{encoder_forward.1} parent=1 // pred_region
      _
    $region45: #{encoder_forward.1} parent=1 // pred_fallthru
      _
    // Predicated region
    $region46: #{encoder_forward.1} parent=1 // pred_check
      _
    $region47: #{encoder_forward.1} parent=1 // pred_check_branch
      %47 = sbr.rel (0) target = $region49
    $region48: #{encoder_forward.1} parent=1 // pred_region
      _
    $region49: #{encoder_forward.1} parent=1 // pred_fallthru
      _
    // Predicated region
    $region50: #{encoder_forward.1} parent=1 // pred_check
      _
    $region51: #{encoder_forward.1} parent=1 // pred_check_branch
      %49 = sbr.rel (0) target = $region53
    $region52: #{encoder_forward.1} parent=1 // pred_region
      _
    $region53: #{encoder_forward.1} parent=1 // pred_fallthru
      _
    // Predicated region
    $region54: #{encoder_forward.1} parent=1 // pred_check
      _
    $region55: #{encoder_forward.1} parent=1 // pred_check_branch
      %51 = sbr.rel (0) target = $region57
    $region56: #{encoder_forward.1} parent=1 // pred_region
      _
    $region57: #{encoder_forward.1} parent=1 // pred_fallthru
      _
    // Predicated region
    $region58: #{encoder_forward.1} parent=1 // pred_check
      _
    $region59: #{encoder_forward.1} parent=1 // pred_check_branch
      %53 = sbr.rel (0) target = $region61
    $region60: #{encoder_forward.1} parent=1 // pred_region
      _
    $region61: #{encoder_forward.1} parent=1 // pred_fallthru
      _
    // Predicated region
    $region62: #{encoder_forward.1} parent=1 // pred_check
      _
    $region63: #{encoder_forward.1} parent=1 // pred_check_branch
      %55 = sbr.rel (0) target = $region65
    $region64: #{encoder_forward.1} parent=1 // pred_region
      _
    $region65: #{encoder_forward.1} parent=1 // pred_fallthru
      _
    %v56 = vld [vmem:[%s0] sm:$0xff]
    %v57 = vld [vmem:[%s0 + $0x8] sm:$0xff]
    %v58 = vlaneseq
    %v59 = vand.u32 %v58, 127
    %60 = vset.pattern.permute.xlu0 0
    %61 = vperm.xlu0 %60, %v56
    %v62 = vpop.permute.xlu0 %61
    %63 = vset.pattern.permute.xlu0 0
    %64 = vperm.xlu0 %63, %v57
    %v65 = vpop.permute.xlu0 %64
    %vm66 = vcmp.eq.s32.totalorder %v59, %v62
    %vm67 = vcmp.eq.s32.totalorder %v59, %v65
    %v68 = vsel %vm66, 1, 0
    %v69 = vsel %vm67, 1, 0
    %v70 = vcvt.s32.f32 %v68
    %v71 = vcvt.s32.f32 %v69
    %v72 = vld [vmem:[%s2] sm:$0xff]
    %v73 = vld [vmem:[%s2 + $0x8] sm:$0xff]
    %v74 = vld [vmem:[%s2 + $0x10] sm:$0xff]
    %v75 = vld [vmem:[%s2 + $0x18] sm:$0xff]
    %v76 = vld [vmem:[%s1] sm:$0xff]
    %v77 = vld [vmem:[%s1 + $0x8] sm:$0xff]
    %vm78 = vcmask 261120
    %v80 = vsel %vm78, %v70, 0
    %v83 = vsel %vm78, %v71, 0
    %85 = vmatpush.msra.mxu0 0.0
    %86 = vmatpush.msra.mxu0 0.0
    %87 = vmatpush.msra.mxu0 0.0
    %88 = vmatpush.msra.mxu0 0.0
    %89 = vmatpush.msra.mxu0 0.0
    %90 = vmatpush.msra.mxu0 0.0
    %91 = vmatpush.msra.mxu0 0.0
    %92 = vmatpush.msra.mxu0 0.0
    %93 = vmatpush.msra.mxu0 0.0
    %94 = vmatpush.msra.mxu0 0.0
    %95 = vmatpush.msra.mxu0 0.0
    %96 = vmatpush.msra.mxu0 0.0
    %97 = vmatpush.msra.mxu0 %v75
    %98 = vmatpush.msra.mxu0 %v74
    %99 = vmatpush.msra.mxu0 %v73
    %100 = vmatpush.msra.mxu0 %v72
    %101 = vmatmul.f32.gmra.mxu0 %v80
    %v102 = vpop.f32.mrf.mxu0
    %v103 = vadd.f32 %v76, %v102
    %104 = vmatmul.f32.gmra.mxu0 %v83
    %v105 = vpop.f32.mrf.mxu0
    %v106 = vadd.f32 %v77, %v105
    %107 = vdwg.mxu0
    %v108 = vld [vmem:[%s3] sm:$0xff]
    %v109 = vld [vmem:[%s3 + $0x8] sm:$0xff]
    %v110 = vld [vmem:[%s3 + $0x10] sm:$0xff]
    %v111 = vld [vmem:[%s3 + $0x18] sm:$0xff]
    %v112 = vld [vmem:[%s3 + $0x20] sm:$0xff]
    %v113 = vld [vmem:[%s3 + $0x28] sm:$0xff]
    %v114 = vld [vmem:[%s3 + $0x30] sm:$0xff]
    %v115 = vld [vmem:[%s3 + $0x38] sm:$0xff]
    %v116 = vld [vmem:[%s3 + $0x40] sm:$0xff]
    %v117 = vld [vmem:[%s3 + $0x48] sm:$0xff]
    %v118 = vld [vmem:[%s3 + $0x50] sm:$0xff]
    %v119 = vld [vmem:[%s3 + $0x58] sm:$0xff]
    %v120 = vld [vmem:[%s3 + $0x60] sm:$0xff]
    %v121 = vld [vmem:[%s3 + $0x68] sm:$0xff]
    %v122 = vld [vmem:[%s3 + $0x70] sm:$0xff]
    %v123 = vld [vmem:[%s3 + $0x78] sm:$0xff]
    %v124 = vld [vmem:[%s4] sm:$0x1]
    %v126 = vperm.slane %v124, 0
    %128 = vmatpush.msra.mxu0 %v123
    %129 = vmatpush.msra.mxu0 %v122
    %130 = vmatpush.msra.mxu0 %v121
    %131 = vmatpush.msra.mxu0 %v120
    %132 = vmatpush.msra.mxu0 %v119
    %133 = vmatpush.msra.mxu0 %v118
    %134 = vmatpush.msra.mxu0 %v117
    %135 = vmatpush.msra.mxu0 %v116
    %136 = vmatpush.msra.mxu0 %v115
    %137 = vmatpush.msra.mxu0 %v114
    %138 = vmatpush.msra.mxu0 %v113
    %139 = vmatpush.msra.mxu0 %v112
    %140 = vmatpush.msra.mxu0 %v111
    %141 = vmatpush.msra.mxu0 %v110
    %142 = vmatpush.msra.mxu0 %v109
    %143 = vmatpush.msra.mxu0 %v108
    %144 = vmatmul.f32.gmra.mxu0 %v103
    %v145 = vpop.f32.mrf.mxu0
    %v146 = vadd.f32 %v126, %v145
    %147 = vmatmul.f32.gmra.mxu0 %v106
    %v148 = vpop.f32.mrf.mxu0
    %v149 = vadd.f32 %v126, %v148
    %150 = vdwg.mxu0
    %v151 = vld [vmem:[%s5] sm:$0xff]
    %v152 = vld [vmem:[%s5 + $0x8] sm:$0xff]
    %v153 = vld [vmem:[%s6] sm:$0xff]
    %v154 = vld [vmem:[%s6 + $0x8] sm:$0xff]
    %vm155 = vcmask 130048
    %v157 = vsel %vm155, %v151, 0
    %v160 = vsel %vm155, %v152, 0
    %162 = vmatpush.msra.mxu0 0.0
    %163 = vmatpush.msra.mxu0 0.0
    %164 = vmatpush.msra.mxu0 0.0
    %165 = vmatpush.msra.mxu0 0.0
    %166 = vmatpush.msra.mxu0 0.0
    %167 = vmatpush.msra.mxu0 0.0
    %168 = vmatpush.msra.mxu0 0.0
    %169 = vmatpush.msra.mxu0 0.0
    %170 = vmatpush.msra.mxu0 0.0
    %171 = vmatpush.msra.mxu0 0.0
    %172 = vmatpush.msra.mxu0 0.0
    %173 = vmatpush.msra.mxu0 0.0
    %174 = vmatpush.msra.mxu0 0.0
    %175 = vmatpush.msra.mxu0 0.0
    %176 = vmatpush.msra.mxu0 %v149
    %177 = vmatpush.msra.mxu0 %v146
    %178 = vmatmul.f32.gmra.mxu0 %v157
    %v179 = vpop.f32.mrf.mxu0
    %v180 = vadd.f32 0.0, %v179
    %181 = vmatmul.f32.gmra.mxu0 %v160
    %v182 = vpop.f32.mrf.mxu0
    %v183 = vadd.f32 0.0, %v182
    %184 = vdwg.mxu0
    %v186 = vsel %vm155, %v153, 0
    %v189 = vsel %vm155, %v154, 0
    %191 = vmatpush.msra.mxu0 0.0
    %192 = vmatpush.msra.mxu0 0.0
    %193 = vmatpush.msra.mxu0 0.0
    %194 = vmatpush.msra.mxu0 0.0
    %195 = vmatpush.msra.mxu0 0.0
    %196 = vmatpush.msra.mxu0 0.0
    %197 = vmatpush.msra.mxu0 0.0
    %198 = vmatpush.msra.mxu0 0.0
    %199 = vmatpush.msra.mxu0 0.0
    %200 = vmatpush.msra.mxu0 0.0
    %201 = vmatpush.msra.mxu0 0.0
    %202 = vmatpush.msra.mxu0 0.0
    %203 = vmatpush.msra.mxu0 0.0
    %204 = vmatpush.msra.mxu0 0.0
    %205 = vmatpush.msra.mxu0 %v149
    %206 = vmatpush.msra.mxu0 %v146
    %207 = vmatmul.f32.gmra.mxu0 %v186
    %v208 = vpop.f32.mrf.mxu0
    %v209 = vadd.f32 0.0, %v208
    %210 = vmatmul.f32.gmra.mxu0 %v189
    %v211 = vpop.f32.mrf.mxu0
    %v212 = vadd.f32 0.0, %v211
    %213 = vdwg.mxu0
    %216 = vrot.lane.b32.xlu0 %v146, 32
    %v217 = vpop.permute.xlu0 %216
    %218 = vrot.lane.b32.xlu0 %v149, 32
    %v219 = vpop.permute.xlu0 %218
    %224 = vrot.lane.b32.xlu0 %v209, 64
    %v225 = vpop.permute.xlu0 %224
    %226 = vrot.lane.b32.xlu0 %v212, 64
    %v227 = vpop.permute.xlu0 %226
    %v230 = vsel %vm78, %v180, %v217
    %v231 = vsel %vm78, %v183, %v219
    %vm232 = vcmask 523264
    %v233 = vsel %vm232, %v230, %v225
    %v234 = vsel %vm232, %v231, %v227
    %v235 = vld [vmem:[%s7] sm:$0xff]
    %v236 = vld [vmem:[%s7 + $0x8] sm:$0xff]
    %v237 = vld [vmem:[%s7 + $0x10] sm:$0xff]
    %v238 = vld [vmem:[%s7 + $0x18] sm:$0xff]
    %v239 = vld [vmem:[%s7 + $0x20] sm:$0xff]
    %v240 = vld [vmem:[%s7 + $0x28] sm:$0xff]
    %v241 = vld [vmem:[%s7 + $0x30] sm:$0xff]
    %v242 = vld [vmem:[%s7 + $0x38] sm:$0xff]
    %v243 = vld [vmem:[%s7 + $0x40] sm:$0xff]
    %v244 = vld [vmem:[%s7 + $0x48] sm:$0xff]
    %v245 = vld [vmem:[%s7 + $0x50] sm:$0xff]
    %v246 = vld [vmem:[%s7 + $0x58] sm:$0xff]
    %v247 = vld [vmem:[%s8] sm:$0x1]
    %v249 = vperm.slane %v247, 0
    %vm251 = vcmask 785408
    %v253 = vsel %vm251, %v233, 0
    %v256 = vsel %vm251, %v234, 0
    %258 = vmatpush.msra.mxu0 0.0
    %259 = vmatpush.msra.mxu0 0.0
    %260 = vmatpush.msra.mxu0 0.0
    %261 = vmatpush.msra.mxu0 0.0
    %262 = vmatpush.msra.mxu0 %v246
    %263 = vmatpush.msra.mxu0 %v245
    %264 = vmatpush.msra.mxu0 %v244
    %265 = vmatpush.msra.mxu0 %v243
    %266 = vmatpush.msra.mxu0 %v242
    %267 = vmatpush.msra.mxu0 %v241
    %268 = vmatpush.msra.mxu0 %v240
    %269 = vmatpush.msra.mxu0 %v239
    %270 = vmatpush.msra.mxu0 %v238
    %271 = vmatpush.msra.mxu0 %v237
    %272 = vmatpush.msra.mxu0 %v236
    %273 = vmatpush.msra.mxu0 %v235
    %274 = vmatmul.f32.gmra.mxu0 %v253
    %v275 = vpop.f32.mrf.mxu0
    %v276 = vadd.f32 %v249, %v275
    %277 = vmatmul.f32.gmra.mxu0 %v256
    %v278 = vpop.f32.mrf.mxu0
    %v279 = vadd.f32 %v249, %v278
    %280 = vdwg.mxu0
    %v281 = vld [vmem:[%s9] sm:$0xff]
    %v282 = vld [vmem:[%s9 + $0x8] sm:$0xff]
    %v283 = vld [vmem:[%s9 + $0x10] sm:$0xff]
    %v284 = vld [vmem:[%s9 + $0x18] sm:$0xff]
    %v285 = vld [vmem:[%s9 + $0x20] sm:$0xff]
    %v286 = vld [vmem:[%s9 + $0x28] sm:$0xff]
    %v287 = vld [vmem:[%s9 + $0x30] sm:$0xff]
    %v288 = vld [vmem:[%s9 + $0x38] sm:$0xff]
    %v289 = vld [vmem:[%s9 + $0x40] sm:$0xff]
    %v290 = vld [vmem:[%s9 + $0x48] sm:$0xff]
    %v291 = vld [vmem:[%s9 + $0x50] sm:$0xff]
    %v292 = vld [vmem:[%s9 + $0x58] sm:$0xff]
    %v293 = vld [vmem:[%s10] sm:$0x1]
    %v295 = vperm.slane %v293, 0
    %297 = vmatpush.msra.mxu0 0.0
    %298 = vmatpush.msra.mxu0 0.0
    %299 = vmatpush.msra.mxu0 0.0
    %300 = vmatpush.msra.mxu0 0.0
    %301 = vmatpush.msra.mxu0 %v292
    %302 = vmatpush.msra.mxu0 %v291
    %303 = vmatpush.msra.mxu0 %v290
    %304 = vmatpush.msra.mxu0 %v289
    %305 = vmatpush.msra.mxu0 %v288
    %306 = vmatpush.msra.mxu0 %v287
    %307 = vmatpush.msra.mxu0 %v286
    %308 = vmatpush.msra.mxu0 %v285
    %309 = vmatpush.msra.mxu0 %v284
    %310 = vmatpush.msra.mxu0 %v283
    %311 = vmatpush.msra.mxu0 %v282
    %312 = vmatpush.msra.mxu0 %v281
    %313 = vmatmul.f32.gmra.mxu0 %v253
    %v314 = vpop.f32.mrf.mxu0
    %v315 = vadd.f32 %v295, %v314
    %316 = vmatmul.f32.gmra.mxu0 %v256
    %v317 = vpop.f32.mrf.mxu0
    %v318 = vadd.f32 %v295, %v317
    %319 = vdwg.mxu0
    %v320 = vxor.u32 %v315, 2147483648
    %v321 = vxor.u32 %v318, 2147483648
    %v322 = vmul.f32 %v320, 1.442695
    %v323 = vpow.pop %v322
    %v324 = vmul.f32 %v321, 1.442695
    %v325 = vpow.pop %v324
    %v326 = vadd.f32 %v323, 1.0
    %v327 = vadd.f32 %v325, 1.0
    %v328 = vrcp.pop %v326
    %v329 = vmul.f32 %v326, %v328
    %v330 = vsub.f32 1.0, %v329
    %v331 = vmul.f32 %v328, %v330
    %v332 = vadd.f32 %v328, %v331
    %vm333 = vweird.f32 %v326
    %vm334 = vweird.f32 %v328
    %vm335 = vmor %vm333, %vm334
    %v336 = vsel %vm335, %v328, %v332
    %v337 = vand.u32 2147483647, %v326
    %vm338 = vcmp.eq.f32.partialorder %v337, 8.507059e+37
    %v339 = vand.u32 %v326, 2147483648
    %v340 = vor.u32 1.1754944e-38, %v339
    %v341 = vsel %vm338, %v340, %v336
    %v342 = vmul.f32 1.0, %v341
    %v343 = vrcp.pop %v327
    %v344 = vmul.f32 %v327, %v343
    %v345 = vsub.f32 1.0, %v344
    %v346 = vmul.f32 %v343, %v345
    %v347 = vadd.f32 %v343, %v346
    %vm348 = vweird.f32 %v327
    %vm349 = vweird.f32 %v343
    %vm350 = vmor %vm348, %vm349
    %v351 = vsel %vm350, %v343, %v347
    %v352 = vand.u32 2147483647, %v327
    %vm353 = vcmp.eq.f32.partialorder %v352, 8.507059e+37
    %v354 = vand.u32 %v327, 2147483648
    %v355 = vor.u32 1.1754944e-38, %v354
    %v356 = vsel %vm353, %v355, %v351
    %v357 = vmul.f32 1.0, %v356
    %v358 = vmul.f32 %v276, %v342
    %v359 = vmul.f32 %v279, %v357
    %v360 = vadd.f32 %v358, %v146
    %v361 = vadd.f32 %v359, %v149
    %v362 = vmul.f32 %v360, 0.70710677
    %v363 = vmul.f32 %v361, 0.70710677
    %364 = vmatpush.msra.mxu0 0.0
    %365 = vmatpush.msra.mxu0 0.0
    %366 = vmatpush.msra.mxu0 0.0
    %367 = vmatpush.msra.mxu0 0.0
    %368 = vmatpush.msra.mxu0 0.0
    %369 = vmatpush.msra.mxu0 0.0
    %370 = vmatpush.msra.mxu0 0.0
    %371 = vmatpush.msra.mxu0 0.0
    %372 = vmatpush.msra.mxu0 0.0
    %373 = vmatpush.msra.mxu0 0.0
    %374 = vmatpush.msra.mxu0 0.0
    %375 = vmatpush.msra.mxu0 0.0
    %376 = vmatpush.msra.mxu0 0.0
    %377 = vmatpush.msra.mxu0 0.0
    %378 = vmatpush.msra.mxu0 %v363
    %379 = vmatpush.msra.mxu0 %v362
    %380 = vmatmul.f32.gmra.mxu0 %v157
    %v381 = vpop.f32.mrf.mxu0
    %v382 = vadd.f32 0.0, %v381
    %383 = vmatmul.f32.gmra.mxu0 %v160
    %v384 = vpop.f32.mrf.mxu0
    %v385 = vadd.f32 0.0, %v384
    %386 = vdwg.mxu0
    %387 = vmatpush.msra.mxu0 0.0
    %388 = vmatpush.msra.mxu0 0.0
    %389 = vmatpush.msra.mxu0 0.0
    %390 = vmatpush.msra.mxu0 0.0
    %391 = vmatpush.msra.mxu0 0.0
    %392 = vmatpush.msra.mxu0 0.0
    %393 = vmatpush.msra.mxu0 0.0
    %394 = vmatpush.msra.mxu0 0.0
    %395 = vmatpush.msra.mxu0 0.0
    %396 = vmatpush.msra.mxu0 0.0
    %397 = vmatpush.msra.mxu0 0.0
    %398 = vmatpush.msra.mxu0 0.0
    %399 = vmatpush.msra.mxu0 0.0
    %400 = vmatpush.msra.mxu0 0.0
    %401 = vmatpush.msra.mxu0 %v363
    %402 = vmatpush.msra.mxu0 %v362
    %403 = vmatmul.f32.gmra.mxu0 %v186
    %v404 = vpop.f32.mrf.mxu0
    %v405 = vadd.f32 0.0, %v404
    %406 = vmatmul.f32.gmra.mxu0 %v189
    %v407 = vpop.f32.mrf.mxu0
    %v408 = vadd.f32 0.0, %v407
    %409 = vdwg.mxu0
    %412 = vrot.lane.b32.xlu0 %v362, 32
    %v413 = vpop.permute.xlu0 %412
    %414 = vrot.lane.b32.xlu0 %v363, 32
    %v415 = vpop.permute.xlu0 %414
    %420 = vrot.lane.b32.xlu0 %v405, 64
    %v421 = vpop.permute.xlu0 %420
    %422 = vrot.lane.b32.xlu0 %v408, 64
    %v423 = vpop.permute.xlu0 %422
    %v426 = vsel %vm78, %v382, %v413
    %v427 = vsel %vm78, %v385, %v415
    %v428 = vsel %vm232, %v426, %v421
    %v429 = vsel %vm232, %v427, %v423
    %s430 = scalar_lea.vmem %s7, 96
    %v431 = vld [vmem:[%s430] sm:$0xff]
    %v432 = vld [vmem:[%s430 + $0x8] sm:$0xff]
    %v433 = vld [vmem:[%s430 + $0x10] sm:$0xff]
    %v434 = vld [vmem:[%s430 + $0x18] sm:$0xff]
    %v435 = vld [vmem:[%s430 + $0x20] sm:$0xff]
    %v436 = vld [vmem:[%s430 + $0x28] sm:$0xff]
    %v437 = vld [vmem:[%s430 + $0x30] sm:$0xff]
    %v438 = vld [vmem:[%s430 + $0x38] sm:$0xff]
    %v439 = vld [vmem:[%s430 + $0x40] sm:$0xff]
    %v440 = vld [vmem:[%s430 + $0x48] sm:$0xff]
    %v441 = vld [vmem:[%s430 + $0x50] sm:$0xff]
    %v442 = vld [vmem:[%s430 + $0x58] sm:$0xff]
    %s443 = scalar_lea.vmem %s8, 1
    %v444 = vld [vmem:[%s443] sm:$0x1]
    %v446 = vperm.slane %v444, 0
    %v449 = vsel %vm251, %v428, 0
    %v452 = vsel %vm251, %v429, 0
    %454 = vmatpush.msra.mxu0 0.0
    %455 = vmatpush.msra.mxu0 0.0
    %456 = vmatpush.msra.mxu0 0.0
    %457 = vmatpush.msra.mxu0 0.0
    %458 = vmatpush.msra.mxu0 %v442
    %459 = vmatpush.msra.mxu0 %v441
    %460 = vmatpush.msra.mxu0 %v440
    %461 = vmatpush.msra.mxu0 %v439
    %462 = vmatpush.msra.mxu0 %v438
    %463 = vmatpush.msra.mxu0 %v437
    %464 = vmatpush.msra.mxu0 %v436
    %465 = vmatpush.msra.mxu0 %v435
    %466 = vmatpush.msra.mxu0 %v434
    %467 = vmatpush.msra.mxu0 %v433
    %468 = vmatpush.msra.mxu0 %v432
    %469 = vmatpush.msra.mxu0 %v431
    %470 = vmatmul.f32.gmra.mxu0 %v449
    %v471 = vpop.f32.mrf.mxu0
    %v472 = vadd.f32 %v446, %v471
    %473 = vmatmul.f32.gmra.mxu0 %v452
    %v474 = vpop.f32.mrf.mxu0
    %v475 = vadd.f32 %v446, %v474
    %476 = vdwg.mxu0
    %s477 = scalar_lea.vmem %s9, 96
    %v478 = vld [vmem:[%s477] sm:$0xff]
    %v479 = vld [vmem:[%s477 + $0x8] sm:$0xff]
    %v480 = vld [vmem:[%s477 + $0x10] sm:$0xff]
    %v481 = vld [vmem:[%s477 + $0x18] sm:$0xff]
    %v482 = vld [vmem:[%s477 + $0x20] sm:$0xff]
    %v483 = vld [vmem:[%s477 + $0x28] sm:$0xff]
    %v484 = vld [vmem:[%s477 + $0x30] sm:$0xff]
    %v485 = vld [vmem:[%s477 + $0x38] sm:$0xff]
    %v486 = vld [vmem:[%s477 + $0x40] sm:$0xff]
    %v487 = vld [vmem:[%s477 + $0x48] sm:$0xff]
    %v488 = vld [vmem:[%s477 + $0x50] sm:$0xff]
    %v489 = vld [vmem:[%s477 + $0x58] sm:$0xff]
    %s490 = scalar_lea.vmem %s10, 1
    %v491 = vld [vmem:[%s490] sm:$0x1]
    %v493 = vperm.slane %v491, 0
    %495 = vmatpush.msra.mxu0 0.0
    %496 = vmatpush.msra.mxu0 0.0
    %497 = vmatpush.msra.mxu0 0.0
    %498 = vmatpush.msra.mxu0 0.0
    %499 = vmatpush.msra.mxu0 %v489
    %500 = vmatpush.msra.mxu0 %v488
    %501 = vmatpush.msra.mxu0 %v487
    %502 = vmatpush.msra.mxu0 %v486
    %503 = vmatpush.msra.mxu0 %v485
    %504 = vmatpush.msra.mxu0 %v484
    %505 = vmatpush.msra.mxu0 %v483
    %506 = vmatpush.msra.mxu0 %v482
    %507 = vmatpush.msra.mxu0 %v481
    %508 = vmatpush.msra.mxu0 %v480
    %509 = vmatpush.msra.mxu0 %v479
    %510 = vmatpush.msra.mxu0 %v478
    %511 = vmatmul.f32.gmra.mxu0 %v449
    %v512 = vpop.f32.mrf.mxu0
    %v513 = vadd.f32 %v493, %v512
    %514 = vmatmul.f32.gmra.mxu0 %v452
    %v515 = vpop.f32.mrf.mxu0
    %v516 = vadd.f32 %v493, %v515
    %517 = vdwg.mxu0
    %v518 = vxor.u32 %v513, 2147483648
    %v519 = vxor.u32 %v516, 2147483648
    %v520 = vmul.f32 %v518, 1.442695
    %v521 = vpow.pop %v520
    %v522 = vmul.f32 %v519, 1.442695
    %v523 = vpow.pop %v522
    %v524 = vadd.f32 %v521, 1.0
    %v525 = vadd.f32 %v523, 1.0
    %v526 = vrcp.pop %v524
    %v527 = vmul.f32 %v524, %v526
    %v528 = vsub.f32 1.0, %v527
    %v529 = vmul.f32 %v526, %v528
    %v530 = vadd.f32 %v526, %v529
    %vm531 = vweird.f32 %v524
    %vm532 = vweird.f32 %v526
    %vm533 = vmor %vm531, %vm532
    %v534 = vsel %vm533, %v526, %v530
    %v535 = vand.u32 2147483647, %v524
    %vm536 = vcmp.eq.f32.partialorder %v535, 8.507059e+37
    %v537 = vand.u32 %v524, 2147483648
    %v538 = vor.u32 1.1754944e-38, %v537
    %v539 = vsel %vm536, %v538, %v534
    %v540 = vmul.f32 1.0, %v539
    %v541 = vrcp.pop %v525
    %v542 = vmul.f32 %v525, %v541
    %v543 = vsub.f32 1.0, %v542
    %v544 = vmul.f32 %v541, %v543
    %v545 = vadd.f32 %v541, %v544
    %vm546 = vweird.f32 %v525
    %vm547 = vweird.f32 %v541
    %vm548 = vmor %vm546, %vm547
    %v549 = vsel %vm548, %v541, %v545
    %v550 = vand.u32 2147483647, %v525
    %vm551 = vcmp.eq.f32.partialorder %v550, 8.507059e+37
    %v552 = vand.u32 %v525, 2147483648
    %v553 = vor.u32 1.1754944e-38, %v552
    %v554 = vsel %vm551, %v553, %v549
    %v555 = vmul.f32 1.0, %v554
    %v556 = vmul.f32 %v472, %v540
    %v557 = vmul.f32 %v475, %v555
    %v558 = vadd.f32 %v556, %v362
    %v559 = vadd.f32 %v557, %v363
    %v560 = vmul.f32 %v558, 0.70710677
    %v561 = vmul.f32 %v559, 0.70710677
    %vm562 = vcmp.ge.s32.totalorder %v59, 64
    %v563 = vsel %vm562, 0.70710677, 0.0
    %v564 = vld [vmem:[%s11] sm:$0xff]
    %v565 = vld [vmem:[%s11 + $0x8] sm:$0xff]
    %v566 = vld [vmem:[%s11 + $0x10] sm:$0xff]
    %v567 = vld [vmem:[%s11 + $0x18] sm:$0xff]
    %v568 = vld [vmem:[%s12] sm:$0x1]
    %v570 = vperm.slane %v568, 0
    %v573 = vsel %vm78, %v560, 0
    %v576 = vsel %vm78, %v561, 0
    %578 = vmatpush.msra.mxu0 0.0
    %579 = vmatpush.msra.mxu0 0.0
    %580 = vmatpush.msra.mxu0 0.0
    %581 = vmatpush.msra.mxu0 0.0
    %582 = vmatpush.msra.mxu0 0.0
    %583 = vmatpush.msra.mxu0 0.0
    %584 = vmatpush.msra.mxu0 0.0
    %585 = vmatpush.msra.mxu0 0.0
    %586 = vmatpush.msra.mxu0 0.0
    %587 = vmatpush.msra.mxu0 0.0
    %588 = vmatpush.msra.mxu0 0.0
    %589 = vmatpush.msra.mxu0 0.0
    %590 = vmatpush.msra.mxu0 %v567
    %591 = vmatpush.msra.mxu0 %v566
    %592 = vmatpush.msra.mxu0 %v565
    %593 = vmatpush.msra.mxu0 %v564
    %594 = vmatmul.f32.gmra.mxu0 %v573
    %v595 = vpop.f32.mrf.mxu0
    %v596 = vadd.f32 %v570, %v595
    %597 = vmatmul.f32.gmra.mxu0 %v576
    %v598 = vpop.f32.mrf.mxu0
    %v599 = vadd.f32 %v570, %v598
    %600 = vdwg.mxu0
    %v601 = vmul.f32 %v103, %v563
    %v602 = vmul.f32 %v106, %v563
    %v603 = vadd.f32 %v596, %v601
    %v604 = vadd.f32 %v599, %v602
    %605 = vst [vmem:[%s16] sm:$0xff] %v603
    %606 = vst [vmem:[%s16 + $0x8] sm:$0xff] %v604
    %v607 = vld [vmem:[%s13] sm:$0x3]
    %v609 = vsel %vm155, %v607, 0
    %611 = vmatpush.msra.mxu0 0.0
    %612 = vmatpush.msra.mxu0 0.0
    %613 = vmatpush.msra.mxu0 0.0
    %614 = vmatpush.msra.mxu0 0.0
    %615 = vmatpush.msra.mxu0 0.0
    %616 = vmatpush.msra.mxu0 0.0
    %617 = vmatpush.msra.mxu0 0.0
    %618 = vmatpush.msra.mxu0 0.0
    %619 = vmatpush.msra.mxu0 0.0
    %620 = vmatpush.msra.mxu0 0.0
    %621 = vmatpush.msra.mxu0 0.0
    %622 = vmatpush.msra.mxu0 0.0
    %623 = vmatpush.msra.mxu0 0.0
    %624 = vmatpush.msra.mxu0 0.0
    %625 = vmatpush.msra.mxu0 %v604
    %626 = vmatpush.msra.mxu0 %v603
    %627 = vmatmul.f32.gmra.mxu0 %v609
    %v628 = vpop.f32.mrf.mxu0
    %v629 = vadd.f32 0.0, %v628
    %630 = vdwg.mxu0
    %v631 = vld [vmem:[%s14] sm:$0xff]
    %v632 = vld [vmem:[%s14 + $0x8] sm:$0xff]
    %v633 = vld [vmem:[%s14 + $0x10] sm:$0xff]
    %v634 = vld [vmem:[%s14 + $0x18] sm:$0xff]
    %v635 = vld [vmem:[%s14 + $0x20] sm:$0xff]
    %v636 = vld [vmem:[%s14 + $0x28] sm:$0xff]
    %v637 = vld [vmem:[%s14 + $0x30] sm:$0xff]
    %v638 = vld [vmem:[%s14 + $0x38] sm:$0xff]
    %v639 = vld [vmem:[%s14 + $0x40] sm:$0xff]
    %v640 = vld [vmem:[%s14 + $0x48] sm:$0xff]
    %v641 = vld [vmem:[%s14 + $0x50] sm:$0xff]
    %v642 = vld [vmem:[%s14 + $0x58] sm:$0xff]
    %v643 = vld [vmem:[%s14 + $0x60] sm:$0xff]
    %v644 = vld [vmem:[%s14 + $0x68] sm:$0xff]
    %v645 = vld [vmem:[%s14 + $0x70] sm:$0xff]
    %v646 = vld [vmem:[%s14 + $0x78] sm:$0xff]
    %v647 = vld [vmem:[%s15] sm:$0x1]
    %v649 = vperm.slane %v647, 0
    %651 = vmatpush.msra.mxu0 %v646
    %652 = vmatpush.msra.mxu0 %v645
    %653 = vmatpush.msra.mxu0 %v644
    %654 = vmatpush.msra.mxu0 %v643
    %655 = vmatpush.msra.mxu0 %v642
    %656 = vmatpush.msra.mxu0 %v641
    %657 = vmatpush.msra.mxu0 %v640
    %658 = vmatpush.msra.mxu0 %v639
    %659 = vmatpush.msra.mxu0 %v638
    %660 = vmatpush.msra.mxu0 %v637
    %661 = vmatpush.msra.mxu0 %v636
    %662 = vmatpush.msra.mxu0 %v635
    %663 = vmatpush.msra.mxu0 %v634
    %664 = vmatpush.msra.mxu0 %v633
    %665 = vmatpush.msra.mxu0 %v632
    %666 = vmatpush.msra.mxu0 %v631
    %667 = vmatmul.f32.gmra.mxu0 %v629
    %v668 = vpop.f32.mrf.mxu0
    %v669 = vadd.f32 %v649, %v668
    %670 = vdwg.mxu0
    %671 = vst [vmem:[#allocation2] sm:$0x3] %v669
    // Predicated region
    $region66: #{encoder_forward.1} parent=1 // pred_check
      _
    $region67: #{encoder_forward.1} parent=1 // pred_check_branch
      %673 = sbr.rel (0) target = $region69
    $region68: #{encoder_forward.1} parent=1 // pred_region
      _
    $region69: #{encoder_forward.1} parent=1 // pred_fallthru
      _
    // Predicated region
    $region70: #{encoder_forward.1} parent=1 // pred_check
      _
    $region71: #{encoder_forward.1} parent=1 // pred_check_branch
      %675 = sbr.rel (0) target = $region73
    $region72: #{encoder_forward.1} parent=1 // pred_region
      %677 = vsyncadd [#allocation3], 0
      %s679 = sshll.u32 [#allocation2], 4
      %s680 = int_to_ptr.vmem [resolvable:$true] %s679
      %s681 = sshll.u32 %s17, 4
      %s682 = int_to_ptr.hbm [resolvable:$true] %s681
      %684 = dma.vmem_to_hbm [thread:$0]  %s680, 32, %s682, [#allocation3]
    $region73: #{encoder_forward.1} parent=1 // pred_fallthru
      _
    // Predicated region
    $region74: #{encoder_forward.1} parent=1 // pred_check
      _
    $region75: #{encoder_forward.1} parent=1 // pred_check_branch
      %686 = sbr.rel (0) target = $region77
    $region76: #{encoder_forward.1} parent=1 // pred_region
      _
    $region77: #{encoder_forward.1} parent=1 // pred_fallthru
      _
    // Predicated region
    $region78: #{encoder_forward.1} parent=1 // pred_check
      _
    $region79: #{encoder_forward.1} parent=1 // pred_check_branch
      %688 = sbr.rel (0) target = $region81
    $region80: #{encoder_forward.1} parent=1 // pred_region
      %690 = dma.done [#allocation3], 32
    $region81: #{encoder_forward.1} parent=1 // pred_fallthru
      _
    %691 = vsyncpa [#allocation3], 1

</llo_original>
